<compile_context>
chip_gen: v7x
topology: tpu7x:2x2x1
jax: 0.10.0
libtpu: 0.0.40
codegen_flags: <defaults>
</compile_context>

<pallas_src>
import jax
import jax.numpy as jnp
from jax.experimental import pallas as pl
from jax.experimental.pallas import tpu as pltpu

IMAGE_DIM = 256   # forced by the module: fc input = 128 + 128 concat
HIDDEN = 128
N_CLASSES = 10
N_PAD = 128       # lane-dense padded class dimension
BATCH = 200       # example batch (non-multiple of 8/128 to exercise raggedness)


def classifier_kernel(obj_ref, bg_ref, w_obj_ref, w_bg_ref, b_br_ref,
                      w_fc_ref, b_fc_ref, out_ref):
    # In-kernel f32 -> bf16 cast of the activations (rides a VPU slot under the
    # MXU); no wrapper-side concat/cast/pad pass over HBM.
    obj = obj_ref[...].astype(jnp.bfloat16)
    bg = bg_ref[...].astype(jnp.bfloat16)

    # Two explicit branch linears, f32 accumulation.  N=128 fills a native MXU
    # tile on every TPU generation; no zero-padded block-diag slab.
    h_obj = jnp.dot(obj, w_obj_ref[...], preferred_element_type=jnp.float32)
    h_bg = jnp.dot(bg, w_bg_ref[...], preferred_element_type=jnp.float32)

    # Implicit torch.cat: lane-concat of two 128-lane tiles, bias + ReLU in f32.
    h = jnp.concatenate([h_obj, h_bg], axis=1) + b_br_ref[...]
    h = jnp.maximum(h, 0.0)

    # Dropout(p=0.2): identity in eval mode.
    # TODO(synk): training-mode dropout (stateful PRNG masking) not implemented.

    # Final linear on the concat, padded to 128 lane-dense output columns.
    out = jnp.dot(h.astype(jnp.bfloat16), w_fc_ref[...],
                  preferred_element_type=jnp.float32) + b_fc_ref[...]
    out_ref[...] = out.astype(out_ref.dtype)


def _pick_block_b(batch):
    """One grid step on single-TC chips (v5e/v6e); two tiles on v7x (2 TCs)."""
    try:
        kind = jax.devices()[0].device_kind.lower()
    except Exception:  # pragma: no cover - defensive, e.g. no devices yet
        kind = ""
    if "v7" in kind and batch > 8:
        half = -(-batch // 2)
        return ((half + 7) // 8) * 8       # sublane-aligned half-batch tile
    return batch                            # full batch -> grid=(1,)


def classifier_forward(obj, bg, params, *, block_b=None):
    B = obj.shape[0]
    if block_b is None:
        block_b = _pick_block_b(B)
    n_tiles = pl.cdiv(B, block_b)

    out = pl.pallas_call(
        classifier_kernel,
        out_shape=jax.ShapeDtypeStruct((B, N_PAD), jnp.bfloat16),
        grid=(n_tiles,),
        in_specs=[
            # activations: tiled along batch (ragged last block handled by Pallas)
            pl.BlockSpec((block_b, IMAGE_DIM), lambda i: (i, 0)),
            pl.BlockSpec((block_b, IMAGE_DIM), lambda i: (i, 0)),
            # weights / biases: constant index_map -> DMA'd once, VMEM-resident
            pl.BlockSpec((IMAGE_DIM, HIDDEN), lambda i: (0, 0)),
            pl.BlockSpec((IMAGE_DIM, HIDDEN), lambda i: (0, 0)),
            pl.BlockSpec((1, 2 * HIDDEN), lambda i: (0, 0)),
            pl.BlockSpec((2 * HIDDEN, N_PAD), lambda i: (0, 0)),
            pl.BlockSpec((1, N_PAD), lambda i: (0, 0)),
        ],
        out_specs=pl.BlockSpec((block_b, N_PAD), lambda i: (i, 0)),
        compiler_params=pltpu.CompilerParams(
            dimension_semantics=("parallel",)),
    )(obj, bg, params["w_obj_bf16"], params["w_bg_bf16"], params["b_branch"],
      params["w_fc_pad"], params["b_fc_pad"])

    return out[:, :N_CLASSES]


def init_params(key):
    """Deterministic init matching the PyTorch parameter shapes.

    PyTorch nn.Linear(in, out) stores weight (out, in); we store the transpose
    (in, out) so the kernel computes x @ W.  Raw f32 params are kept for the
    reference; bf16 / lane-padded slabs are built once for the kernel.
    """
    ks = jax.random.split(key, 6)
    bound_lin = 1.0 / jnp.sqrt(IMAGE_DIM)
    bound_fc = 1.0 / jnp.sqrt(2 * HIDDEN)
    p = {
        "w_obj": jax.random.uniform(ks[0], (IMAGE_DIM, HIDDEN), jnp.float32,
                                    -bound_lin, bound_lin),
        "b_obj": jax.random.uniform(ks[1], (1, HIDDEN), jnp.float32,
                                    -bound_lin, bound_lin),
        "w_bg": jax.random.uniform(ks[2], (IMAGE_DIM, HIDDEN), jnp.float32,
                                   -bound_lin, bound_lin),
        "b_bg": jax.random.uniform(ks[3], (1, HIDDEN), jnp.float32,
                                   -bound_lin, bound_lin),
        "w_fc": jax.random.uniform(ks[4], (2 * HIDDEN, N_CLASSES), jnp.float32,
                                   -bound_fc, bound_fc),
        "b_fc": jax.random.uniform(ks[5], (1, N_CLASSES), jnp.float32,
                                   -bound_fc, bound_fc),
    }

    # Packed kernel operands (one-time prep, not part of the hot path).
    p["w_obj_bf16"] = p["w_obj"].astype(jnp.bfloat16)            # (256, 128)
    p["w_bg_bf16"] = p["w_bg"].astype(jnp.bfloat16)              # (256, 128)
    p["b_branch"] = jnp.concatenate([p["b_obj"], p["b_bg"]], axis=1)  # (1, 256)
    p["w_fc_pad"] = jnp.pad(p["w_fc"],
                            ((0, 0), (0, N_PAD - N_CLASSES))
                            ).astype(jnp.bfloat16)               # (256, 128)
    p["b_fc_pad"] = jnp.pad(p["b_fc"], ((0, 0), (0, N_PAD - N_CLASSES)))
    return p


def reference_forward(obj, bg, params):
    h_obj = jnp.maximum(obj @ params["w_obj"] + params["b_obj"], 0.0)
    h_bg = jnp.maximum(bg @ params["w_bg"] + params["b_bg"], 0.0)
    concat = jnp.concatenate([h_obj, h_bg], axis=1)
    return concat @ params["w_fc"] + params["b_fc"]


if __name__ == "__main__":
    key = jax.random.PRNGKey(0)
    k_obj, k_bg, k_param = jax.random.split(key, 3)

    obj = jax.random.normal(k_obj, (BATCH, IMAGE_DIM), jnp.float32)
    bg = jax.random.normal(k_bg, (BATCH, IMAGE_DIM), jnp.float32)
    params = init_params(k_param)

    out = classifier_forward(obj, bg, params)
    out = jax.block_until_ready(out)

    ref = reference_forward(obj, bg, params)
    assert out.shape == (BATCH, N_CLASSES)
    # bf16 weights/activations/output with f32 accumulation -> relaxed tolerance.
    assert jnp.allclose(out.astype(jnp.float32), ref, atol=5e-2, rtol=5e-2), \
        float(jnp.max(jnp.abs(out.astype(jnp.float32) - ref)))

    print("KERNEL_OK")
</pallas_src>

<mosaic_0001>
module attributes {stable_mosaic.version = 11 : i64} {
  func.func @classifier_kernel(%arg0: i32, %arg1: memref<200x256xf32, #tpu.memory_space<vmem>>, %arg2: memref<200x256xf32, #tpu.memory_space<vmem>>, %arg3: memref<256x128xbf16, #tpu.memory_space<vmem>>, %arg4: memref<256x128xbf16, #tpu.memory_space<vmem>>, %arg5: memref<1x256xf32, #tpu.memory_space<vmem>>, %arg6: memref<256x128xbf16, #tpu.memory_space<vmem>>, %arg7: memref<1x128xf32, #tpu.memory_space<vmem>>, %arg8: memref<200x128xbf16, #tpu.memory_space<vmem>>) attributes {dimension_semantics = [#tpu.dimension_semantics<parallel>], iteration_bounds = array<i64: 1>, scalar_prefetch = 0 : i64, scratch_operands = 0 : i64, tpu.core_type = #tpu.core_type<tc>, window_params = [{transform_indices = @transform_0, window_bounds = array<i64: 200, 256>}, {transform_indices = @transform_1, window_bounds = array<i64: 200, 256>}, {pipeline_mode = #tpu.pipeline_mode<synchronous>, transform_indices = @transform_2, window_bounds = array<i64: 256, 128>}, {pipeline_mode = #tpu.pipeline_mode<synchronous>, transform_indices = @transform_3, window_bounds = array<i64: 256, 128>}, {pipeline_mode = #tpu.pipeline_mode<synchronous>, transform_indices = @transform_4, window_bounds = array<i64: 1, 256>}, {pipeline_mode = #tpu.pipeline_mode<synchronous>, transform_indices = @transform_5, window_bounds = array<i64: 256, 128>}, {pipeline_mode = #tpu.pipeline_mode<synchronous>, transform_indices = @transform_6, window_bounds = array<i64: 1, 128>}, {transform_indices = @transform_7, window_bounds = array<i64: 200, 128>}]} {
    %c0 = arith.constant 0 : index
    %c0_0 = arith.constant 0 : index
    %0 = vector.load %arg1[%c0, %c0_0] : memref<200x256xf32, #tpu.memory_space<vmem>>, vector<200x256xf32>
    %1 = arith.truncf %0 : vector<200x256xf32> to vector<200x256xbf16>
    %c0_1 = arith.constant 0 : index
    %c0_2 = arith.constant 0 : index
    %2 = vector.load %arg2[%c0_1, %c0_2] : memref<200x256xf32, #tpu.memory_space<vmem>>, vector<200x256xf32>
    %3 = arith.truncf %2 : vector<200x256xf32> to vector<200x256xbf16>
    %c0_3 = arith.constant 0 : index
    %c0_4 = arith.constant 0 : index
    %4 = vector.load %arg3[%c0_3, %c0_4] : memref<256x128xbf16, #tpu.memory_space<vmem>>, vector<256x128xbf16>
    %cst = arith.constant dense<0.000000e+00> : vector<200x128xf32>
    %5 = tpu.matmul %1, %4, %cst {dimension_numbers = #tpu.dot_dimension_numbers<[1], [0], [0], [1], [0, 0, 1, 1], [], []>} : vector<200x256xbf16>, vector<256x128xbf16>, vector<200x128xf32> -> vector<200x128xf32>
    %c0_5 = arith.constant 0 : index
    %c0_6 = arith.constant 0 : index
    %6 = vector.load %arg4[%c0_5, %c0_6] : memref<256x128xbf16, #tpu.memory_space<vmem>>, vector<256x128xbf16>
    %cst_7 = arith.constant dense<0.000000e+00> : vector<200x128xf32>
    %7 = tpu.matmul %3, %6, %cst_7 {dimension_numbers = #tpu.dot_dimension_numbers<[1], [0], [0], [1], [0, 0, 1, 1], [], []>} : vector<200x256xbf16>, vector<256x128xbf16>, vector<200x128xf32> -> vector<200x128xf32>
    %8 = tpu.concatenate %5, %7 in 1 : vector<200x128xf32>, vector<200x128xf32> -> vector<200x256xf32>
    %c0_8 = arith.constant 0 : index
    %c0_9 = arith.constant 0 : index
    %9 = vector.load %arg5[%c0_8, %c0_9] : memref<1x256xf32, #tpu.memory_space<vmem>>, vector<1x256xf32>
    %10 = vector.broadcast %9 : vector<1x256xf32> to vector<200x256xf32>
    %11 = arith.addf %8, %10 : vector<200x256xf32>
    %cst_10 = arith.constant 0.000000e+00 : f32
    %12 = vector.broadcast %cst_10 : f32 to vector<200x256xf32>
    %13 = arith.maximumf %11, %12 : vector<200x256xf32>
    %14 = arith.truncf %13 : vector<200x256xf32> to vector<200x256xbf16>
    %c0_11 = arith.constant 0 : index
    %c0_12 = arith.constant 0 : index
    %15 = vector.load %arg6[%c0_11, %c0_12] : memref<256x128xbf16, #tpu.memory_space<vmem>>, vector<256x128xbf16>
    %cst_13 = arith.constant dense<0.000000e+00> : vector<200x128xf32>
    %16 = tpu.matmul %14, %15, %cst_13 {dimension_numbers = #tpu.dot_dimension_numbers<[1], [0], [0], [1], [0, 0, 1, 1], [], []>} : vector<200x256xbf16>, vector<256x128xbf16>, vector<200x128xf32> -> vector<200x128xf32>
    %c0_14 = arith.constant 0 : index
    %c0_15 = arith.constant 0 : index
    %17 = vector.load %arg7[%c0_14, %c0_15] : memref<1x128xf32, #tpu.memory_space<vmem>>, vector<1x128xf32>
    %18 = vector.broadcast %17 : vector<1x128xf32> to vector<200x128xf32>
    %19 = arith.addf %16, %18 : vector<200x128xf32>
    %20 = arith.truncf %19 : vector<200x128xf32> to vector<200x128xbf16>
    %c0_16 = arith.constant 0 : index
    %c0_17 = arith.constant 0 : index
    %21 = vector.load %arg8[%c0_16, %c0_17] : memref<200x128xbf16, #tpu.memory_space<vmem>>, vector<200x128xbf16>
    tpu.vector_store %arg8[%c0_16, %c0_17], %20 {strides = array<i32>} : memref<200x128xbf16, #tpu.memory_space<vmem>>, vector<200x128xbf16>,
    return
  }
  func.func @transform_0(%arg0: i32) -> (i32, i32) {
    %c0_i32 = arith.constant 0 : i32
    %c0_i32_0 = arith.constant 0 : i32
    return %arg0, %c0_i32 : i32, i32
  }
  func.func @transform_1(%arg0: i32) -> (i32, i32) {
    %c0_i32 = arith.constant 0 : i32
    %c0_i32_0 = arith.constant 0 : i32
    return %arg0, %c0_i32 : i32, i32
  }
  func.func @transform_2(%arg0: i32) -> (i32, i32) {
    %c0_i32 = arith.constant 0 : i32
    %c0_i32_0 = arith.constant 0 : i32
    %c0_i32_1 = arith.constant 0 : i32
    return %c0_i32, %c0_i32_0 : i32, i32
  }
  func.func @transform_3(%arg0: i32) -> (i32, i32) {
    %c0_i32 = arith.constant 0 : i32
    %c0_i32_0 = arith.constant 0 : i32
    %c0_i32_1 = arith.constant 0 : i32
    return %c0_i32, %c0_i32_0 : i32, i32
  }
  func.func @transform_4(%arg0: i32) -> (i32, i32) {
    %c0_i32 = arith.constant 0 : i32
    %c0_i32_0 = arith.constant 0 : i32
    %c0_i32_1 = arith.constant 0 : i32
    return %c0_i32, %c0_i32_0 : i32, i32
  }
  func.func @transform_5(%arg0: i32) -> (i32, i32) {
    %c0_i32 = arith.constant 0 : i32
    %c0_i32_0 = arith.constant 0 : i32
    %c0_i32_1 = arith.constant 0 : i32
    return %c0_i32, %c0_i32_0 : i32, i32
  }
  func.func @transform_6(%arg0: i32) -> (i32, i32) {
    %c0_i32 = arith.constant 0 : i32
    %c0_i32_0 = arith.constant 0 : i32
    %c0_i32_1 = arith.constant 0 : i32
    return %c0_i32, %c0_i32_0 : i32, i32
  }
  func.func @transform_7(%arg0: i32) -> (i32, i32) {
    %c0_i32 = arith.constant 0 : i32
    %c0_i32_0 = arith.constant 0 : i32
    return %arg0, %c0_i32 : i32, i32
  }
}

</mosaic_0001>

<llo_original>
// kernel: tpu_custom_call.1
$region0: #{tpu_custom_call.1}
  #allocation0 [shape = 'u32[]', space=smem, size = 0x4, offset = 0x4, fixed_abs, tag = 'smem constant byte address 0x4 - core index']
  #allocation1 [shape = 'u32[144,128]{1,0:T(1,128)}', space=vmem, size = 0x12000, scoped, tag = 'internal scratch']
  %s0 = inlined_call_operand.hbm [shape: f32[200,256], index: 0, kind: input, shape index: {}]
  %s1 = inlined_call_operand.hbm [shape: f32[200,256], index: 1, kind: input, shape index: {}]
  %s2 = inlined_call_operand.hbm [shape: bf16[256,128], index: 2, kind: input, shape index: {}]
  %s3 = inlined_call_operand.hbm [shape: bf16[256,128], index: 3, kind: input, shape index: {}]
  %s4 = inlined_call_operand.vmem [shape: f32[1,256], index: 4, kind: input, shape index: {}]
  %s5 = inlined_call_operand.hbm [shape: bf16[256,128], index: 5, kind: input, shape index: {}]
  %s6 = inlined_call_operand.vmem [shape: f32[1,128], index: 6, kind: input, shape index: {}]
  %s7 = inlined_call_operand.hbm [shape: bf16[200,128], index: 7, kind: output, shape index: {}]
  %s8 = sld [smem:[#allocation0]]
  $region58: #{tpu_custom_call.1} parent=0
    _
  %s10 = ssub.s32 1, %s8
  %s11 = scalar_select 0, %s10, %s8
  $region1: #{tpu_custom_call.1} parent=0
    #allocation2 [shape = 'u8[204800]{0}', space=vmem, size = 0x32000, scoped, tag = 'input window, operand 0, single buffered']
    #allocation3 [shape = 's32[1]{0}', space=sflag, size = 0x4, scoped, tag = 'scoped memory for tpu_custom_call.1']
    #allocation4 [shape = 's32[1]{0}', space=sflag, size = 0x4, scoped, tag = 'scoped memory for tpu_custom_call.1']
    #allocation5 [shape = 'u8[204800]{0}', space=vmem, size = 0x32000, scoped, tag = 'input window, operand 1, single buffered']
    #allocation6 [shape = 's32[1]{0}', space=sflag, size = 0x4, scoped, tag = 'scoped memory for tpu_custom_call.1']
    #allocation7 [shape = 'u8[65536]{0}', space=vmem, size = 0x10000, scoped, tag = 'input window, operand 2, single buffered']
    #allocation8 [shape = 'u8[65536]{0}', space=vmem, size = 0x10000, scoped, tag = 'input window, operand 3, single buffered']
    #allocation9 [shape = 's32[1]{0}', space=sflag, size = 0x4, scoped, tag = 'scoped memory for tpu_custom_call.1']
    #allocation10 [shape = 'u8[65536]{0}', space=vmem, size = 0x10000, scoped, tag = 'input window, operand 5, single buffered']
    #allocation11 [shape = 'u8[51200]{0}', space=vmem, size = 0xc800, scoped, tag = 'output window, operand 0, single buffered']
    %12 = vsyncpa [#allocation3], 0
    %13 = vsyncpa [#allocation6], 0
    %14 = vsyncpa [#allocation9], 0
    %15 = vsyncpa [#allocation4], 0
    // Predicated region
    $region2: #{tpu_custom_call.1} parent=1 // pred_check
      _
    $region3: #{tpu_custom_call.1} parent=1 // pred_check_branch
      %17 = sbr.rel (0) target = $region5
    $region4: #{tpu_custom_call.1} parent=1 // pred_region
      %s19 = ssub.s32 6400, 6400
      %20 = vsyncadd [#allocation3], %s19
      %s21 = sshll.u32 [#allocation2], 4
      %s22 = int_to_ptr.vmem [resolvable:$true] %s21
      %27 = dma.hbm_to_vmem [thread:$0]  %s0, 6400, %s22, [#allocation3], 256, 256, 16
    $region5: #{tpu_custom_call.1} parent=1 // pred_fallthru
      _
    // Predicated region
    $region6: #{tpu_custom_call.1} parent=1 // pred_check
      _
    $region7: #{tpu_custom_call.1} parent=1 // pred_check_branch
      %29 = sbr.rel (0) target = $region9
    $region8: #{tpu_custom_call.1} parent=1 // pred_region
      %s31 = ssub.s32 6400, 6400
      %32 = vsyncadd [#allocation6], %s31
      %s33 = sshll.u32 [#allocation5], 4
      %s34 = int_to_ptr.vmem [resolvable:$true] %s33
      %39 = dma.hbm_to_vmem [thread:$0]  %s1, 6400, %s34, [#allocation6], 256, 256, 16
    $region9: #{tpu_custom_call.1} parent=1 // pred_fallthru
      _
    // Predicated region
    $region10: #{tpu_custom_call.1} parent=1 // pred_check
      _
    $region11: #{tpu_custom_call.1} parent=1 // pred_check_branch
      %41 = sbr.rel (0) target = $region13
    $region12: #{tpu_custom_call.1} parent=1 // pred_region
      %s43 = ssub.s32 2048, 2048
      %44 = vsyncadd [#allocation6], %s43
      %s45 = sshll.u32 [#allocation7], 4
      %s46 = int_to_ptr.vmem [resolvable:$true] %s45
      %51 = dma.hbm_to_vmem [thread:$0]  %s2, 2048, %s46, [#allocation6], 64, 64, 4
    $region13: #{tpu_custom_call.1} parent=1 // pred_fallthru
      _
    // Predicated region
    $region14: #{tpu_custom_call.1} parent=1 // pred_check
      _
    $region15: #{tpu_custom_call.1} parent=1 // pred_check_branch
      %53 = sbr.rel (0) target = $region17
    $region16: #{tpu_custom_call.1} parent=1 // pred_region
      %s55 = ssub.s32 2048, 2048
      %56 = vsyncadd [#allocation9], %s55
      %s57 = sshll.u32 [#allocation8], 4
      %s58 = int_to_ptr.vmem [resolvable:$true] %s57
      %63 = dma.hbm_to_vmem [thread:$0]  %s3, 2048, %s58, [#allocation9], 64, 64, 4
    $region17: #{tpu_custom_call.1} parent=1 // pred_fallthru
      _
    // Predicated region
    $region18: #{tpu_custom_call.1} parent=1 // pred_check
      _
    $region19: #{tpu_custom_call.1} parent=1 // pred_check_branch
      %65 = sbr.rel (0) target = $region21
    $region20: #{tpu_custom_call.1} parent=1 // pred_region
      _
    $region21: #{tpu_custom_call.1} parent=1 // pred_fallthru
      _
    // Predicated region
    $region22: #{tpu_custom_call.1} parent=1 // pred_check
      _
    $region23: #{tpu_custom_call.1} parent=1 // pred_check_branch
      %67 = sbr.rel (0) target = $region25
    $region24: #{tpu_custom_call.1} parent=1 // pred_region
      %s69 = ssub.s32 2048, 2048
      %70 = vsyncadd [#allocation9], %s69
      %s71 = sshll.u32 [#allocation10], 4
      %s72 = int_to_ptr.vmem [resolvable:$true] %s71
      %77 = dma.hbm_to_vmem [thread:$0]  %s5, 2048, %s72, [#allocation9], 64, 64, 4
    $region25: #{tpu_custom_call.1} parent=1 // pred_fallthru
      _
    // Predicated region
    $region26: #{tpu_custom_call.1} parent=1 // pred_check
      _
    $region27: #{tpu_custom_call.1} parent=1 // pred_check_branch
      %79 = sbr.rel (0) target = $region29
    $region28: #{tpu_custom_call.1} parent=1 // pred_region
      _
    $region29: #{tpu_custom_call.1} parent=1 // pred_fallthru
      _
    // Predicated region
    $region30: #{tpu_custom_call.1} parent=1 // pred_check
      _
    $region31: #{tpu_custom_call.1} parent=1 // pred_check_branch
      %81 = sbr.rel (0) target = $region33
    $region32: #{tpu_custom_call.1} parent=1 // pred_region
      %82 = dma.done [#allocation3], 6400
    $region33: #{tpu_custom_call.1} parent=1 // pred_fallthru
      _
    // Predicated region
    $region34: #{tpu_custom_call.1} parent=1 // pred_check
      _
    $region35: #{tpu_custom_call.1} parent=1 // pred_check_branch
      %84 = sbr.rel (0) target = $region37
    $region36: #{tpu_custom_call.1} parent=1 // pred_region
      %85 = dma.done [#allocation6], 6400
    $region37: #{tpu_custom_call.1} parent=1 // pred_fallthru
      _
    // Predicated region
    $region38: #{tpu_custom_call.1} parent=1 // pred_check
      _
    $region39: #{tpu_custom_call.1} parent=1 // pred_check_branch
      %87 = sbr.rel (0) target = $region41
    $region40: #{tpu_custom_call.1} parent=1 // pred_region
      %88 = dma.done [#allocation6], 2048
    $region41: #{tpu_custom_call.1} parent=1 // pred_fallthru
      _
    // Predicated region
    $region42: #{tpu_custom_call.1} parent=1 // pred_check
      _
    $region43: #{tpu_custom_call.1} parent=1 // pred_check_branch
      %90 = sbr.rel (0) target = $region45
    $region44: #{tpu_custom_call.1} parent=1 // pred_region
      %91 = dma.done [#allocation9], 2048
    $region45: #{tpu_custom_call.1} parent=1 // pred_fallthru
      _
    // Predicated region
    $region46: #{tpu_custom_call.1} parent=1 // pred_check
      _
    $region47: #{tpu_custom_call.1} parent=1 // pred_check_branch
      %93 = sbr.rel (0) target = $region49
    $region48: #{tpu_custom_call.1} parent=1 // pred_region
      %94 = dma.done [#allocation9], 2048
    $region49: #{tpu_custom_call.1} parent=1 // pred_fallthru
      _
    %v96 = vld [vmem:[#allocation2] sm:$0xff]
    %v97 = vld [vmem:[#allocation2 + $0x8] sm:$0xff]
    %v98 = vld [vmem:[#allocation2 + $0x10] sm:$0xff]
    %v99 = vld [vmem:[#allocation2 + $0x18] sm:$0xff]
    %v100 = vld [vmem:[#allocation2 + $0x20] sm:$0xff]
    %v101 = vld [vmem:[#allocation2 + $0x28] sm:$0xff]
    %v102 = vld [vmem:[#allocation2 + $0x30] sm:$0xff]
    %v103 = vld [vmem:[#allocation2 + $0x38] sm:$0xff]
    %v104 = vld [vmem:[#allocation2 + $0x40] sm:$0xff]
    %v105 = vld [vmem:[#allocation2 + $0x48] sm:$0xff]
    %v106 = vld [vmem:[#allocation2 + $0x50] sm:$0xff]
    %v107 = vld [vmem:[#allocation2 + $0x58] sm:$0xff]
    %v108 = vld [vmem:[#allocation2 + $0x60] sm:$0xff]
    %v109 = vld [vmem:[#allocation2 + $0x68] sm:$0xff]
    %v110 = vld [vmem:[#allocation2 + $0x70] sm:$0xff]
    %v111 = vld [vmem:[#allocation2 + $0x78] sm:$0xff]
    %v112 = vld [vmem:[#allocation2 + $0x80] sm:$0xff]
    %v113 = vld [vmem:[#allocation2 + $0x88] sm:$0xff]
    %v114 = vld [vmem:[#allocation2 + $0x90] sm:$0xff]
    %v115 = vld [vmem:[#allocation2 + $0x98] sm:$0xff]
    %v116 = vld [vmem:[#allocation2 + $0xa0] sm:$0xff]
    %v117 = vld [vmem:[#allocation2 + $0xa8] sm:$0xff]
    %v118 = vld [vmem:[#allocation2 + $0xb0] sm:$0xff]
    %v119 = vld [vmem:[#allocation2 + $0xb8] sm:$0xff]
    %v120 = vld [vmem:[#allocation2 + $0xc0] sm:$0xff]
    %v121 = vld [vmem:[#allocation2 + $0xc8] sm:$0xff]
    %v122 = vld [vmem:[#allocation2 + $0xd0] sm:$0xff]
    %v123 = vld [vmem:[#allocation2 + $0xd8] sm:$0xff]
    %v124 = vld [vmem:[#allocation2 + $0xe0] sm:$0xff]
    %v125 = vld [vmem:[#allocation2 + $0xe8] sm:$0xff]
    %v126 = vld [vmem:[#allocation2 + $0xf0] sm:$0xff]
    %v127 = vld [vmem:[#allocation2 + $0xf8] sm:$0xff]
    %v128 = vld [vmem:[#allocation2 + $0x100] sm:$0xff]
    %v129 = vld [vmem:[#allocation2 + $0x108] sm:$0xff]
    %v130 = vld [vmem:[#allocation2 + $0x110] sm:$0xff]
    %v131 = vld [vmem:[#allocation2 + $0x118] sm:$0xff]
    %v132 = vld [vmem:[#allocation2 + $0x120] sm:$0xff]
    %v133 = vld [vmem:[#allocation2 + $0x128] sm:$0xff]
    %v134 = vld [vmem:[#allocation2 + $0x130] sm:$0xff]
    %v135 = vld [vmem:[#allocation2 + $0x138] sm:$0xff]
    %v136 = vld [vmem:[#allocation2 + $0x140] sm:$0xff]
    %v137 = vld [vmem:[#allocation2 + $0x148] sm:$0xff]
    %v138 = vld [vmem:[#allocation2 + $0x150] sm:$0xff]
    %v139 = vld [vmem:[#allocation2 + $0x158] sm:$0xff]
    %v140 = vld [vmem:[#allocation2 + $0x160] sm:$0xff]
    %v141 = vld [vmem:[#allocation2 + $0x168] sm:$0xff]
    %v142 = vld [vmem:[#allocation2 + $0x170] sm:$0xff]
    %v143 = vld [vmem:[#allocation2 + $0x178] sm:$0xff]
    %v144 = vld [vmem:[#allocation2 + $0x180] sm:$0xff]
    %v145 = vld [vmem:[#allocation2 + $0x188] sm:$0xff]
    %v146 = vpack.c.bf16 %v98, %v96
    %v147 = vpack.c.bf16 %v99, %v97
    %v148 = vpack.c.bf16 %v102, %v100
    %v149 = vpack.c.bf16 %v103, %v101
    %v150 = vpack.c.bf16 %v106, %v104
    %v151 = vpack.c.bf16 %v107, %v105
    %v152 = vpack.c.bf16 %v110, %v108
    %v153 = vpack.c.bf16 %v111, %v109
    %v154 = vpack.c.bf16 %v114, %v112
    %v155 = vpack.c.bf16 %v115, %v113
    %v156 = vpack.c.bf16 %v118, %v116
    %v157 = vpack.c.bf16 %v119, %v117
    %v158 = vpack.c.bf16 %v122, %v120
    %v159 = vpack.c.bf16 %v123, %v121
    %v160 = vpack.c.bf16 %v126, %v124
    %v161 = vpack.c.bf16 %v127, %v125
    %v162 = vpack.c.bf16 %v130, %v128
    %v163 = vpack.c.bf16 %v131, %v129
    %v164 = vpack.c.bf16 %v134, %v132
    %v165 = vpack.c.bf16 %v135, %v133
    %v166 = vpack.c.bf16 %v138, %v136
    %v167 = vpack.c.bf16 %v139, %v137
    %v168 = vpack.c.bf16 %v142, %v140
    %v169 = vpack.c.bf16 %v143, %v141
    %v170 = vpack.c.bf16 %v144, %v144
    %v171 = vpack.c.bf16 %v145, %v145
    %v172 = vld [vmem:[#allocation5] sm:$0xff]
    %v173 = vld [vmem:[#allocation5 + $0x8] sm:$0xff]
    %v174 = vld [vmem:[#allocation5 + $0x10] sm:$0xff]
    %v175 = vld [vmem:[#allocation5 + $0x18] sm:$0xff]
    %v176 = vld [vmem:[#allocation5 + $0x20] sm:$0xff]
    %v177 = vld [vmem:[#allocation5 + $0x28] sm:$0xff]
    %v178 = vld [vmem:[#allocation5 + $0x30] sm:$0xff]
    %v179 = vld [vmem:[#allocation5 + $0x38] sm:$0xff]
    %v180 = vld [vmem:[#allocation5 + $0x40] sm:$0xff]
    %v181 = vld [vmem:[#allocation5 + $0x48] sm:$0xff]
    %v182 = vld [vmem:[#allocation5 + $0x50] sm:$0xff]
    %v183 = vld [vmem:[#allocation5 + $0x58] sm:$0xff]
    %v184 = vld [vmem:[#allocation5 + $0x60] sm:$0xff]
    %v185 = vld [vmem:[#allocation5 + $0x68] sm:$0xff]
    %v186 = vld [vmem:[#allocation5 + $0x70] sm:$0xff]
    %v187 = vld [vmem:[#allocation5 + $0x78] sm:$0xff]
    %v188 = vld [vmem:[#allocation5 + $0x80] sm:$0xff]
    %v189 = vld [vmem:[#allocation5 + $0x88] sm:$0xff]
    %v190 = vld [vmem:[#allocation5 + $0x90] sm:$0xff]
    %v191 = vld [vmem:[#allocation5 + $0x98] sm:$0xff]
    %v192 = vld [vmem:[#allocation5 + $0xa0] sm:$0xff]
    %v193 = vld [vmem:[#allocation5 + $0xa8] sm:$0xff]
    %v194 = vld [vmem:[#allocation5 + $0xb0] sm:$0xff]
    %v195 = vld [vmem:[#allocation5 + $0xb8] sm:$0xff]
    %v196 = vld [vmem:[#allocation5 + $0xc0] sm:$0xff]
    %v197 = vld [vmem:[#allocation5 + $0xc8] sm:$0xff]
    %v198 = vld [vmem:[#allocation5 + $0xd0] sm:$0xff]
    %v199 = vld [vmem:[#allocation5 + $0xd8] sm:$0xff]
    %v200 = vld [vmem:[#allocation5 + $0xe0] sm:$0xff]
    %v201 = vld [vmem:[#allocation5 + $0xe8] sm:$0xff]
    %v202 = vld [vmem:[#allocation5 + $0xf0] sm:$0xff]
    %v203 = vld [vmem:[#allocation5 + $0xf8] sm:$0xff]
    %v204 = vld [vmem:[#allocation5 + $0x100] sm:$0xff]
    %v205 = vld [vmem:[#allocation5 + $0x108] sm:$0xff]
    %v206 = vld [vmem:[#allocation5 + $0x110] sm:$0xff]
    %v207 = vld [vmem:[#allocation5 + $0x118] sm:$0xff]
    %v208 = vld [vmem:[#allocation5 + $0x120] sm:$0xff]
    %v209 = vld [vmem:[#allocation5 + $0x128] sm:$0xff]
    %v210 = vld [vmem:[#allocation5 + $0x130] sm:$0xff]
    %v211 = vld [vmem:[#allocation5 + $0x138] sm:$0xff]
    %v212 = vld [vmem:[#allocation5 + $0x140] sm:$0xff]
    %v213 = vld [vmem:[#allocation5 + $0x148] sm:$0xff]
    %v214 = vld [vmem:[#allocation5 + $0x150] sm:$0xff]
    %v215 = vld [vmem:[#allocation5 + $0x158] sm:$0xff]
    %v216 = vld [vmem:[#allocation5 + $0x160] sm:$0xff]
    %v217 = vld [vmem:[#allocation5 + $0x168] sm:$0xff]
    %v218 = vld [vmem:[#allocation5 + $0x170] sm:$0xff]
    %v219 = vld [vmem:[#allocation5 + $0x178] sm:$0xff]
    %v220 = vld [vmem:[#allocation5 + $0x180] sm:$0xff]
    %v221 = vld [vmem:[#allocation5 + $0x188] sm:$0xff]
    %v222 = vpack.c.bf16 %v174, %v172
    %v223 = vpack.c.bf16 %v175, %v173
    %v224 = vpack.c.bf16 %v178, %v176
    %v225 = vpack.c.bf16 %v179, %v177
    %v226 = vpack.c.bf16 %v182, %v180
    %v227 = vpack.c.bf16 %v183, %v181
    %v228 = vpack.c.bf16 %v186, %v184
    %v229 = vpack.c.bf16 %v187, %v185
    %v230 = vpack.c.bf16 %v190, %v188
    %v231 = vpack.c.bf16 %v191, %v189
    %v232 = vpack.c.bf16 %v194, %v192
    %v233 = vpack.c.bf16 %v195, %v193
    %v234 = vpack.c.bf16 %v198, %v196
    %v235 = vpack.c.bf16 %v199, %v197
    %v236 = vpack.c.bf16 %v202, %v200
    %v237 = vpack.c.bf16 %v203, %v201
    %v238 = vpack.c.bf16 %v206, %v204
    %v239 = vpack.c.bf16 %v207, %v205
    %v240 = vpack.c.bf16 %v210, %v208
    %v241 = vpack.c.bf16 %v211, %v209
    %v242 = vpack.c.bf16 %v214, %v212
    %v243 = vpack.c.bf16 %v215, %v213
    %v244 = vpack.c.bf16 %v218, %v216
    %v245 = vpack.c.bf16 %v219, %v217
    %v246 = vpack.c.bf16 %v220, %v220
    %v247 = vpack.c.bf16 %v221, %v221
    %v248 = vld [vmem:[#allocation7] sm:$0xf]
    %v249 = vld [vmem:[#allocation7 + $0x4] sm:$0xf]
    %v250 = vld [vmem:[#allocation7 + $0x8] sm:$0xf]
    %v251 = vld [vmem:[#allocation7 + $0xc] sm:$0xf]
    %v252 = vld [vmem:[#allocation7 + $0x10] sm:$0xf]
    %v253 = vld [vmem:[#allocation7 + $0x14] sm:$0xf]
    %v254 = vld [vmem:[#allocation7 + $0x18] sm:$0xf]
    %v255 = vld [vmem:[#allocation7 + $0x1c] sm:$0xf]
    %v256 = vld [vmem:[#allocation7 + $0x20] sm:$0xf]
    %v257 = vld [vmem:[#allocation7 + $0x24] sm:$0xf]
    %v258 = vld [vmem:[#allocation7 + $0x28] sm:$0xf]
    %v259 = vld [vmem:[#allocation7 + $0x2c] sm:$0xf]
    %v260 = vld [vmem:[#allocation7 + $0x30] sm:$0xf]
    %v261 = vld [vmem:[#allocation7 + $0x34] sm:$0xf]
    %v262 = vld [vmem:[#allocation7 + $0x38] sm:$0xf]
    %v263 = vld [vmem:[#allocation7 + $0x3c] sm:$0xf]
    %v264 = vld [vmem:[#allocation7 + $0x40] sm:$0xf]
    %v265 = vld [vmem:[#allocation7 + $0x44] sm:$0xf]
    %v266 = vld [vmem:[#allocation7 + $0x48] sm:$0xf]
    %v267 = vld [vmem:[#allocation7 + $0x4c] sm:$0xf]
    %v268 = vld [vmem:[#allocation7 + $0x50] sm:$0xf]
    %v269 = vld [vmem:[#allocation7 + $0x54] sm:$0xf]
    %v270 = vld [vmem:[#allocation7 + $0x58] sm:$0xf]
    %v271 = vld [vmem:[#allocation7 + $0x5c] sm:$0xf]
    %v272 = vld [vmem:[#allocation7 + $0x60] sm:$0xf]
    %v273 = vld [vmem:[#allocation7 + $0x64] sm:$0xf]
    %v274 = vld [vmem:[#allocation7 + $0x68] sm:$0xf]
    %v275 = vld [vmem:[#allocation7 + $0x6c] sm:$0xf]
    %v276 = vld [vmem:[#allocation7 + $0x70] sm:$0xf]
    %v277 = vld [vmem:[#allocation7 + $0x74] sm:$0xf]
    %v278 = vld [vmem:[#allocation7 + $0x78] sm:$0xf]
    %v279 = vld [vmem:[#allocation7 + $0x7c] sm:$0xf]
    %v312 = vunpack.c.l.b16 %v248
    %v313 = vunpack.c.l.b16 %v249
    %v314 = vunpack.c.l.b16 %v250
    %v315 = vunpack.c.l.b16 %v251
    %v316 = vunpack.c.l.b16 %v252
    %v317 = vunpack.c.l.b16 %v253
    %v318 = vunpack.c.l.b16 %v254
    %v319 = vunpack.c.l.b16 %v255
    %v320 = vunpack.c.l.b16 %v256
    %v321 = vunpack.c.l.b16 %v257
    %v322 = vunpack.c.l.b16 %v258
    %v323 = vunpack.c.l.b16 %v259
    %v324 = vunpack.c.l.b16 %v260
    %v325 = vunpack.c.l.b16 %v261
    %v326 = vunpack.c.l.b16 %v262
    %v327 = vunpack.c.l.b16 %v263
    %v328 = vunpack.c.l.b16 %v264
    %v329 = vunpack.c.l.b16 %v265
    %v330 = vunpack.c.l.b16 %v266
    %v331 = vunpack.c.l.b16 %v267
    %v332 = vunpack.c.l.b16 %v268
    %v333 = vunpack.c.l.b16 %v269
    %v334 = vunpack.c.l.b16 %v270
    %v335 = vunpack.c.l.b16 %v271
    %v336 = vunpack.c.l.b16 %v272
    %v337 = vunpack.c.l.b16 %v273
    %v338 = vunpack.c.l.b16 %v274
    %v339 = vunpack.c.l.b16 %v275
    %v340 = vunpack.c.l.b16 %v276
    %v341 = vunpack.c.l.b16 %v277
    %v342 = vunpack.c.l.b16 %v278
    %v343 = vunpack.c.l.b16 %v279
    %v344 = vpack.c.b16 %v313, %v312
    %v345 = vpack.c.b16 %v315, %v314
    %v346 = vpack.c.b16 %v317, %v316
    %v347 = vpack.c.b16 %v319, %v318
    %v348 = vpack.c.b16 %v321, %v320
    %v349 = vpack.c.b16 %v323, %v322
    %v350 = vpack.c.b16 %v325, %v324
    %v351 = vpack.c.b16 %v327, %v326
    %v352 = vpack.c.b16 %v329, %v328
    %v353 = vpack.c.b16 %v331, %v330
    %v354 = vpack.c.b16 %v333, %v332
    %v355 = vpack.c.b16 %v335, %v334
    %v356 = vpack.c.b16 %v337, %v336
    %v357 = vpack.c.b16 %v339, %v338
    %v358 = vpack.c.b16 %v341, %v340
    %v359 = vpack.c.b16 %v343, %v342
    %376 = vmatprep.subr.bf16.mxu0 0
    %377 = vmatpush1.bf16.msra.mxu0 %v344
    %378 = vmatprep.subr.bf16.mxu0 0
    %379 = vmatpush1.bf16.msra.mxu0 %v345
    %380 = vmatprep.subr.bf16.mxu0 0
    %381 = vmatpush1.bf16.msra.mxu0 %v346
    %382 = vmatprep.subr.bf16.mxu0 0
    %383 = vmatpush1.bf16.msra.mxu0 %v347
    %384 = vmatprep.subr.bf16.mxu0 0
    %385 = vmatpush1.bf16.msra.mxu0 %v348
    %386 = vmatprep.subr.bf16.mxu0 0
    %387 = vmatpush1.bf16.msra.mxu0 %v349
    %388 = vmatprep.subr.bf16.mxu0 0
    %389 = vmatpush1.bf16.msra.mxu0 %v350
    %390 = vmatprep.subr.bf16.mxu0 0
    %391 = vmatpush1.bf16.msra.mxu0 %v351
    %392 = vmatprep.subr.bf16.mxu0 0
    %393 = vmatpush1.bf16.msra.mxu0 %v352
    %394 = vmatprep.subr.bf16.mxu0 0
    %395 = vmatpush1.bf16.msra.mxu0 %v353
    %396 = vmatprep.subr.bf16.mxu0 0
    %397 = vmatpush1.bf16.msra.mxu0 %v354
    %398 = vmatprep.subr.bf16.mxu0 0
    %399 = vmatpush1.bf16.msra.mxu0 %v355
    %400 = vmatprep.subr.bf16.mxu0 0
    %401 = vmatpush1.bf16.msra.mxu0 %v356
    %402 = vmatprep.subr.bf16.mxu0 0
    %403 = vmatpush1.bf16.msra.mxu0 %v357
    %404 = vmatprep.subr.bf16.mxu0 0
    %405 = vmatpush1.bf16.msra.mxu0 %v358
    %406 = vmatprep.subr.bf16.mxu0 0
    %407 = vmatpush1.bf16.msra.mxu0 %v359
    %408 = vmatprep.mubr.bf16.mxu0 %v147
    %409 = vmatmul.mubr.bf16.gmra.mrb[0].mxu0 %v146
    %v410 = vpop.f32.mrb[0].mxu0
    %v411 = vadd.f32 0.0, %v410
    %v412 = vpop.f32.mrb[0].mxu0
    %v413 = vpop.f32.mrb[0].mxu0
    %v414 = vadd.f32 0.0, %v413
    %v415 = vpop.f32.mrb[0].mxu0
    %416 = vmatprep.mubr.bf16.mxu0 %v149
    %417 = vmatmul.mubr.bf16.gmra.mrb[0].mxu0 %v148
    %v418 = vpop.f32.mrb[0].mxu0
    %v419 = vadd.f32 0.0, %v418
    %v420 = vpop.f32.mrb[0].mxu0
    %v421 = vpop.f32.mrb[0].mxu0
    %v422 = vadd.f32 0.0, %v421
    %v423 = vpop.f32.mrb[0].mxu0
    %424 = vmatprep.mubr.bf16.mxu0 %v151
    %425 = vmatmul.mubr.bf16.gmra.mrb[0].mxu0 %v150
    %v426 = vpop.f32.mrb[0].mxu0
    %v427 = vadd.f32 0.0, %v426
    %v428 = vpop.f32.mrb[0].mxu0
    %v429 = vpop.f32.mrb[0].mxu0
    %v430 = vadd.f32 0.0, %v429
    %v431 = vpop.f32.mrb[0].mxu0
    %432 = vmatprep.mubr.bf16.mxu0 %v153
    %433 = vmatmul.mubr.bf16.gmra.mrb[0].mxu0 %v152
    %v434 = vpop.f32.mrb[0].mxu0
    %v435 = vadd.f32 0.0, %v434
    %v436 = vpop.f32.mrb[0].mxu0
    %v437 = vpop.f32.mrb[0].mxu0
    %v438 = vadd.f32 0.0, %v437
    %v439 = vpop.f32.mrb[0].mxu0
    %440 = vmatprep.mubr.bf16.mxu0 %v155
    %441 = vmatmul.mubr.bf16.gmra.mrb[0].mxu0 %v154
    %v442 = vpop.f32.mrb[0].mxu0
    %v443 = vadd.f32 0.0, %v442
    %v444 = vpop.f32.mrb[0].mxu0
    %v445 = vpop.f32.mrb[0].mxu0
    %v446 = vadd.f32 0.0, %v445
    %v447 = vpop.f32.mrb[0].mxu0
    %448 = vmatprep.mubr.bf16.mxu0 %v157
    %449 = vmatmul.mubr.bf16.gmra.mrb[0].mxu0 %v156
    %v450 = vpop.f32.mrb[0].mxu0
    %v451 = vadd.f32 0.0, %v450
    %v452 = vpop.f32.mrb[0].mxu0
    %v453 = vpop.f32.mrb[0].mxu0
    %v454 = vadd.f32 0.0, %v453
    %v455 = vpop.f32.mrb[0].mxu0
    %456 = vmatprep.mubr.bf16.mxu0 %v159
    %457 = vmatmul.mubr.bf16.gmra.mrb[0].mxu0 %v158
    %v458 = vpop.f32.mrb[0].mxu0
    %v459 = vadd.f32 0.0, %v458
    %v460 = vpop.f32.mrb[0].mxu0
    %v461 = vpop.f32.mrb[0].mxu0
    %v462 = vadd.f32 0.0, %v461
    %v463 = vpop.f32.mrb[0].mxu0
    %464 = vmatprep.mubr.bf16.mxu0 %v161
    %465 = vmatmul.mubr.bf16.gmra.mrb[0].mxu0 %v160
    %v466 = vpop.f32.mrb[0].mxu0
    %v467 = vadd.f32 0.0, %v466
    %v468 = vpop.f32.mrb[0].mxu0
    %v469 = vpop.f32.mrb[0].mxu0
    %v470 = vadd.f32 0.0, %v469
    %v471 = vpop.f32.mrb[0].mxu0
    %472 = vmatprep.mubr.bf16.mxu0 %v163
    %473 = vmatmul.mubr.bf16.gmra.mrb[0].mxu0 %v162
    %v474 = vpop.f32.mrb[0].mxu0
    %v475 = vadd.f32 0.0, %v474
    %v476 = vpop.f32.mrb[0].mxu0
    %v477 = vpop.f32.mrb[0].mxu0
    %v478 = vadd.f32 0.0, %v477
    %v479 = vpop.f32.mrb[0].mxu0
    %480 = vmatprep.mubr.bf16.mxu0 %v165
    %481 = vmatmul.mubr.bf16.gmra.mrb[0].mxu0 %v164
    %v482 = vpop.f32.mrb[0].mxu0
    %v483 = vadd.f32 0.0, %v482
    %v484 = vpop.f32.mrb[0].mxu0
    %v485 = vpop.f32.mrb[0].mxu0
    %v486 = vadd.f32 0.0, %v485
    %v487 = vpop.f32.mrb[0].mxu0
    %488 = vmatprep.mubr.bf16.mxu0 %v167
    %489 = vmatmul.mubr.bf16.gmra.mrb[0].mxu0 %v166
    %v490 = vpop.f32.mrb[0].mxu0
    %v491 = vadd.f32 0.0, %v490
    %v492 = vpop.f32.mrb[0].mxu0
    %v493 = vpop.f32.mrb[0].mxu0
    %v494 = vadd.f32 0.0, %v493
    %v495 = vpop.f32.mrb[0].mxu0
    %496 = vmatprep.mubr.bf16.mxu0 %v169
    %497 = vmatmul.mubr.bf16.gmra.mrb[0].mxu0 %v168
    %v498 = vpop.f32.mrb[0].mxu0
    %v499 = vadd.f32 0.0, %v498
    %v500 = vpop.f32.mrb[0].mxu0
    %v501 = vpop.f32.mrb[0].mxu0
    %v502 = vadd.f32 0.0, %v501
    %v503 = vpop.f32.mrb[0].mxu0
    %504 = vmatprep.mubr.bf16.mxu0 %v171
    %505 = vmatmul.mubr.bf16.gmra.mrb[0].mxu0 %v170
    %v506 = vpop.f32.mrb[0].mxu0
    %v507 = vadd.f32 0.0, %v506
    %v508 = vpop.f32.mrb[0].mxu0
    %v509 = vpop.f32.mrb[0].mxu0
    %v510 = vpop.f32.mrb[0].mxu0
    %511 = vdwg.mxu0
    %v512 = vld [vmem:[#allocation8] sm:$0xf]
    %v513 = vld [vmem:[#allocation8 + $0x4] sm:$0xf]
    %v514 = vld [vmem:[#allocation8 + $0x8] sm:$0xf]
    %v515 = vld [vmem:[#allocation8 + $0xc] sm:$0xf]
    %v516 = vld [vmem:[#allocation8 + $0x10] sm:$0xf]
    %v517 = vld [vmem:[#allocation8 + $0x14] sm:$0xf]
    %v518 = vld [vmem:[#allocation8 + $0x18] sm:$0xf]
    %v519 = vld [vmem:[#allocation8 + $0x1c] sm:$0xf]
    %v520 = vld [vmem:[#allocation8 + $0x20] sm:$0xf]
    %v521 = vld [vmem:[#allocation8 + $0x24] sm:$0xf]
    %v522 = vld [vmem:[#allocation8 + $0x28] sm:$0xf]
    %v523 = vld [vmem:[#allocation8 + $0x2c] sm:$0xf]
    %v524 = vld [vmem:[#allocation8 + $0x30] sm:$0xf]
    %v525 = vld [vmem:[#allocation8 + $0x34] sm:$0xf]
    %v526 = vld [vmem:[#allocation8 + $0x38] sm:$0xf]
    %v527 = vld [vmem:[#allocation8 + $0x3c] sm:$0xf]
    %v528 = vld [vmem:[#allocation8 + $0x40] sm:$0xf]
    %v529 = vld [vmem:[#allocation8 + $0x44] sm:$0xf]
    %v530 = vld [vmem:[#allocation8 + $0x48] sm:$0xf]
    %v531 = vld [vmem:[#allocation8 + $0x4c] sm:$0xf]
    %v532 = vld [vmem:[#allocation8 + $0x50] sm:$0xf]
    %v533 = vld [vmem:[#allocation8 + $0x54] sm:$0xf]
    %v534 = vld [vmem:[#allocation8 + $0x58] sm:$0xf]
    %v535 = vld [vmem:[#allocation8 + $0x5c] sm:$0xf]
    %v536 = vld [vmem:[#allocation8 + $0x60] sm:$0xf]
    %v537 = vld [vmem:[#allocation8 + $0x64] sm:$0xf]
    %v538 = vld [vmem:[#allocation8 + $0x68] sm:$0xf]
    %v539 = vld [vmem:[#allocation8 + $0x6c] sm:$0xf]
    %v540 = vld [vmem:[#allocation8 + $0x70] sm:$0xf]
    %v541 = vld [vmem:[#allocation8 + $0x74] sm:$0xf]
    %v542 = vld [vmem:[#allocation8 + $0x78] sm:$0xf]
    %v543 = vld [vmem:[#allocation8 + $0x7c] sm:$0xf]
    %v576 = vunpack.c.l.b16 %v512
    %v577 = vunpack.c.l.b16 %v513
    %v578 = vunpack.c.l.b16 %v514
    %v579 = vunpack.c.l.b16 %v515
    %v580 = vunpack.c.l.b16 %v516
    %v581 = vunpack.c.l.b16 %v517
    %v582 = vunpack.c.l.b16 %v518
    %v583 = vunpack.c.l.b16 %v519
    %v584 = vunpack.c.l.b16 %v520
    %v585 = vunpack.c.l.b16 %v521
    %v586 = vunpack.c.l.b16 %v522
    %v587 = vunpack.c.l.b16 %v523
    %v588 = vunpack.c.l.b16 %v524
    %v589 = vunpack.c.l.b16 %v525
    %v590 = vunpack.c.l.b16 %v526
    %v591 = vunpack.c.l.b16 %v527
    %v592 = vunpack.c.l.b16 %v528
    %v593 = vunpack.c.l.b16 %v529
    %v594 = vunpack.c.l.b16 %v530
    %v595 = vunpack.c.l.b16 %v531
    %v596 = vunpack.c.l.b16 %v532
    %v597 = vunpack.c.l.b16 %v533
    %v598 = vunpack.c.l.b16 %v534
    %v599 = vunpack.c.l.b16 %v535
    %v600 = vunpack.c.l.b16 %v536
    %v601 = vunpack.c.l.b16 %v537
    %v602 = vunpack.c.l.b16 %v538
    %v603 = vunpack.c.l.b16 %v539
    %v604 = vunpack.c.l.b16 %v540
    %v605 = vunpack.c.l.b16 %v541
    %v606 = vunpack.c.l.b16 %v542
    %v607 = vunpack.c.l.b16 %v543
    %v608 = vpack.c.b16 %v577, %v576
    %v609 = vpack.c.b16 %v579, %v578
    %v610 = vpack.c.b16 %v581, %v580
    %v611 = vpack.c.b16 %v583, %v582
    %v612 = vpack.c.b16 %v585, %v584
    %v613 = vpack.c.b16 %v587, %v586
    %v614 = vpack.c.b16 %v589, %v588
    %v615 = vpack.c.b16 %v591, %v590
    %v616 = vpack.c.b16 %v593, %v592
    %v617 = vpack.c.b16 %v595, %v594
    %v618 = vpack.c.b16 %v597, %v596
    %v619 = vpack.c.b16 %v599, %v598
    %v620 = vpack.c.b16 %v601, %v600
    %v621 = vpack.c.b16 %v603, %v602
    %v622 = vpack.c.b16 %v605, %v604
    %v623 = vpack.c.b16 %v607, %v606
    %640 = vmatprep.subr.bf16.mxu0 0
    %641 = vmatpush1.bf16.msra.mxu0 %v608
    %642 = vmatprep.subr.bf16.mxu0 0
    %643 = vmatpush1.bf16.msra.mxu0 %v609
    %644 = vmatprep.subr.bf16.mxu0 0
    %645 = vmatpush1.bf16.msra.mxu0 %v610
    %646 = vmatprep.subr.bf16.mxu0 0
    %647 = vmatpush1.bf16.msra.mxu0 %v611
    %648 = vmatprep.subr.bf16.mxu0 0
    %649 = vmatpush1.bf16.msra.mxu0 %v612
    %650 = vmatprep.subr.bf16.mxu0 0
    %651 = vmatpush1.bf16.msra.mxu0 %v613
    %652 = vmatprep.subr.bf16.mxu0 0
    %653 = vmatpush1.bf16.msra.mxu0 %v614
    %654 = vmatprep.subr.bf16.mxu0 0
    %655 = vmatpush1.bf16.msra.mxu0 %v615
    %656 = vmatprep.subr.bf16.mxu0 0
    %657 = vmatpush1.bf16.msra.mxu0 %v616
    %658 = vmatprep.subr.bf16.mxu0 0
    %659 = vmatpush1.bf16.msra.mxu0 %v617
    %660 = vmatprep.subr.bf16.mxu0 0
    %661 = vmatpush1.bf16.msra.mxu0 %v618
    %662 = vmatprep.subr.bf16.mxu0 0
    %663 = vmatpush1.bf16.msra.mxu0 %v619
    %664 = vmatprep.subr.bf16.mxu0 0
    %665 = vmatpush1.bf16.msra.mxu0 %v620
    %666 = vmatprep.subr.bf16.mxu0 0
    %667 = vmatpush1.bf16.msra.mxu0 %v621
    %668 = vmatprep.subr.bf16.mxu0 0
    %669 = vmatpush1.bf16.msra.mxu0 %v622
    %670 = vmatprep.subr.bf16.mxu0 0
    %671 = vmatpush1.bf16.msra.mxu0 %v623
    %672 = vmatprep.mubr.bf16.mxu0 %v223
    %673 = vmatmul.mubr.bf16.gmra.mrb[0].mxu0 %v222
    %v674 = vpop.f32.mrb[0].mxu0
    %v675 = vadd.f32 0.0, %v674
    %v676 = vpop.f32.mrb[0].mxu0
    %v677 = vpop.f32.mrb[0].mxu0
    %v678 = vadd.f32 0.0, %v677
    %v679 = vpop.f32.mrb[0].mxu0
    %680 = vmatprep.mubr.bf16.mxu0 %v225
    %681 = vmatmul.mubr.bf16.gmra.mrb[0].mxu0 %v224
    %v682 = vpop.f32.mrb[0].mxu0
    %v683 = vadd.f32 0.0, %v682
    %v684 = vpop.f32.mrb[0].mxu0
    %v685 = vpop.f32.mrb[0].mxu0
    %v686 = vadd.f32 0.0, %v685
    %v687 = vpop.f32.mrb[0].mxu0
    %688 = vmatprep.mubr.bf16.mxu0 %v227
    %689 = vmatmul.mubr.bf16.gmra.mrb[0].mxu0 %v226
    %v690 = vpop.f32.mrb[0].mxu0
    %v691 = vadd.f32 0.0, %v690
    %v692 = vpop.f32.mrb[0].mxu0
    %v693 = vpop.f32.mrb[0].mxu0
    %v694 = vadd.f32 0.0, %v693
    %v695 = vpop.f32.mrb[0].mxu0
    %696 = vmatprep.mubr.bf16.mxu0 %v229
    %697 = vmatmul.mubr.bf16.gmra.mrb[0].mxu0 %v228
    %v698 = vpop.f32.mrb[0].mxu0
    %v699 = vadd.f32 0.0, %v698
    %v700 = vpop.f32.mrb[0].mxu0
    %v701 = vpop.f32.mrb[0].mxu0
    %v702 = vadd.f32 0.0, %v701
    %v703 = vpop.f32.mrb[0].mxu0
    %704 = vmatprep.mubr.bf16.mxu0 %v231
    %705 = vmatmul.mubr.bf16.gmra.mrb[0].mxu0 %v230
    %v706 = vpop.f32.mrb[0].mxu0
    %v707 = vadd.f32 0.0, %v706
    %v708 = vpop.f32.mrb[0].mxu0
    %v709 = vpop.f32.mrb[0].mxu0
    %v710 = vadd.f32 0.0, %v709
    %v711 = vpop.f32.mrb[0].mxu0
    %712 = vmatprep.mubr.bf16.mxu0 %v233
    %713 = vmatmul.mubr.bf16.gmra.mrb[0].mxu0 %v232
    %v714 = vpop.f32.mrb[0].mxu0
    %v715 = vadd.f32 0.0, %v714
    %v716 = vpop.f32.mrb[0].mxu0
    %v717 = vpop.f32.mrb[0].mxu0
    %v718 = vadd.f32 0.0, %v717
    %v719 = vpop.f32.mrb[0].mxu0
    %720 = vmatprep.mubr.bf16.mxu0 %v235
    %721 = vmatmul.mubr.bf16.gmra.mrb[0].mxu0 %v234
    %v722 = vpop.f32.mrb[0].mxu0
    %v723 = vadd.f32 0.0, %v722
    %v724 = vpop.f32.mrb[0].mxu0
    %v725 = vpop.f32.mrb[0].mxu0
    %v726 = vadd.f32 0.0, %v725
    %v727 = vpop.f32.mrb[0].mxu0
    %728 = vmatprep.mubr.bf16.mxu0 %v237
    %729 = vmatmul.mubr.bf16.gmra.mrb[0].mxu0 %v236
    %v730 = vpop.f32.mrb[0].mxu0
    %v731 = vadd.f32 0.0, %v730
    %v732 = vpop.f32.mrb[0].mxu0
    %v733 = vpop.f32.mrb[0].mxu0
    %v734 = vadd.f32 0.0, %v733
    %v735 = vpop.f32.mrb[0].mxu0
    %736 = vmatprep.mubr.bf16.mxu0 %v239
    %737 = vmatmul.mubr.bf16.gmra.mrb[0].mxu0 %v238
    %v738 = vpop.f32.mrb[0].mxu0
    %v739 = vadd.f32 0.0, %v738
    %v740 = vpop.f32.mrb[0].mxu0
    %v741 = vpop.f32.mrb[0].mxu0
    %v742 = vadd.f32 0.0, %v741
    %v743 = vpop.f32.mrb[0].mxu0
    %744 = vmatprep.mubr.bf16.mxu0 %v241
    %745 = vmatmul.mubr.bf16.gmra.mrb[0].mxu0 %v240
    %v746 = vpop.f32.mrb[0].mxu0
    %v747 = vadd.f32 0.0, %v746
    %v748 = vpop.f32.mrb[0].mxu0
    %v749 = vpop.f32.mrb[0].mxu0
    %v750 = vadd.f32 0.0, %v749
    %v751 = vpop.f32.mrb[0].mxu0
    %752 = vmatprep.mubr.bf16.mxu0 %v243
    %753 = vmatmul.mubr.bf16.gmra.mrb[0].mxu0 %v242
    %v754 = vpop.f32.mrb[0].mxu0
    %v755 = vadd.f32 0.0, %v754
    %v756 = vpop.f32.mrb[0].mxu0
    %v757 = vpop.f32.mrb[0].mxu0
    %v758 = vadd.f32 0.0, %v757
    %v759 = vpop.f32.mrb[0].mxu0
    %760 = vmatprep.mubr.bf16.mxu0 %v245
    %761 = vmatmul.mubr.bf16.gmra.mrb[0].mxu0 %v244
    %v762 = vpop.f32.mrb[0].mxu0
    %v763 = vadd.f32 0.0, %v762
    %v764 = vpop.f32.mrb[0].mxu0
    %v765 = vpop.f32.mrb[0].mxu0
    %v766 = vadd.f32 0.0, %v765
    %v767 = vpop.f32.mrb[0].mxu0
    %768 = vmatprep.mubr.bf16.mxu0 %v247
    %769 = vmatmul.mubr.bf16.gmra.mrb[0].mxu0 %v246
    %v770 = vpop.f32.mrb[0].mxu0
    %v771 = vadd.f32 0.0, %v770
    %v772 = vpop.f32.mrb[0].mxu0
    %v773 = vpop.f32.mrb[0].mxu0
    %v774 = vpop.f32.mrb[0].mxu0
    %775 = vdwg.mxu0
    %v776 = vld [vmem:[%s4] sm:$0x3]
    %v778 = vlaneseq
    %v779 = vshrl.u32 %v778, 7
    %v780 = vsub.s32 0, %v779
    %v781 = vrot.slane %v776, %v780
    %v782 = vlaneseq
    %v783 = vshrl.u32 %v782, 7
    %v784 = vsub.s32 1, %v783
    %v785 = vrot.slane %v776, %v784
    %v788 = vadd.f32 %v411, %v781
    %v789 = vadd.f32 %v675, %v785
    %v790 = vadd.f32 %v414, %v781
    %v791 = vadd.f32 %v678, %v785
    %v792 = vadd.f32 %v419, %v781
    %v793 = vadd.f32 %v683, %v785
    %v794 = vadd.f32 %v422, %v781
    %v795 = vadd.f32 %v686, %v785
    %v796 = vadd.f32 %v427, %v781
    %v797 = vadd.f32 %v691, %v785
    %v798 = vadd.f32 %v430, %v781
    %v799 = vadd.f32 %v694, %v785
    %v800 = vadd.f32 %v435, %v781
    %v801 = vadd.f32 %v699, %v785
    %v802 = vadd.f32 %v438, %v781
    %v803 = vadd.f32 %v702, %v785
    %v804 = vadd.f32 %v443, %v781
    %v805 = vadd.f32 %v707, %v785
    %v806 = vadd.f32 %v446, %v781
    %v807 = vadd.f32 %v710, %v785
    %v808 = vadd.f32 %v451, %v781
    %v809 = vadd.f32 %v715, %v785
    %v810 = vadd.f32 %v454, %v781
    %v811 = vadd.f32 %v718, %v785
    %v812 = vadd.f32 %v459, %v781
    %v813 = vadd.f32 %v723, %v785
    %v814 = vadd.f32 %v462, %v781
    %v815 = vadd.f32 %v726, %v785
    %v816 = vadd.f32 %v467, %v781
    %v817 = vadd.f32 %v731, %v785
    %v818 = vadd.f32 %v470, %v781
    %v819 = vadd.f32 %v734, %v785
    %v820 = vadd.f32 %v475, %v781
    %v821 = vadd.f32 %v739, %v785
    %v822 = vadd.f32 %v478, %v781
    %v823 = vadd.f32 %v742, %v785
    %v824 = vadd.f32 %v483, %v781
    %v825 = vadd.f32 %v747, %v785
    %v826 = vadd.f32 %v486, %v781
    %v827 = vadd.f32 %v750, %v785
    %v828 = vadd.f32 %v491, %v781
    %v829 = vadd.f32 %v755, %v785
    %v830 = vadd.f32 %v494, %v781
    %v831 = vadd.f32 %v758, %v785
    %v832 = vadd.f32 %v499, %v781
    %v833 = vadd.f32 %v763, %v785
    %v834 = vadd.f32 %v502, %v781
    %v835 = vadd.f32 %v766, %v785
    %v836 = vadd.f32 %v507, %v781
    %v837 = vadd.f32 %v771, %v785
    %v838 = vmax.f32 %v788, 0.0
    %v839 = vmax.f32 %v789, 0.0
    %v840 = vmax.f32 %v790, 0.0
    %v841 = vmax.f32 %v791, 0.0
    %v842 = vmax.f32 %v792, 0.0
    %v843 = vmax.f32 %v793, 0.0
    %v844 = vmax.f32 %v794, 0.0
    %v845 = vmax.f32 %v795, 0.0
    %v846 = vmax.f32 %v796, 0.0
    %v847 = vmax.f32 %v797, 0.0
    %v848 = vmax.f32 %v798, 0.0
    %v849 = vmax.f32 %v799, 0.0
    %v850 = vmax.f32 %v800, 0.0
    %v851 = vmax.f32 %v801, 0.0
    %v852 = vmax.f32 %v802, 0.0
    %v853 = vmax.f32 %v803, 0.0
    %v854 = vmax.f32 %v804, 0.0
    %v855 = vmax.f32 %v805, 0.0
    %v856 = vmax.f32 %v806, 0.0
    %v857 = vmax.f32 %v807, 0.0
    %v858 = vmax.f32 %v808, 0.0
    %v859 = vmax.f32 %v809, 0.0
    %v860 = vmax.f32 %v810, 0.0
    %v861 = vmax.f32 %v811, 0.0
    %v862 = vmax.f32 %v812, 0.0
    %v863 = vmax.f32 %v813, 0.0
    %v864 = vmax.f32 %v814, 0.0
    %v865 = vmax.f32 %v815, 0.0
    %v866 = vmax.f32 %v816, 0.0
    %v867 = vmax.f32 %v817, 0.0
    %v868 = vmax.f32 %v818, 0.0
    %v869 = vmax.f32 %v819, 0.0
    %v870 = vmax.f32 %v820, 0.0
    %v871 = vmax.f32 %v821, 0.0
    %v872 = vmax.f32 %v822, 0.0
    %v873 = vmax.f32 %v823, 0.0
    %v874 = vmax.f32 %v824, 0.0
    %v875 = vmax.f32 %v825, 0.0
    %v876 = vmax.f32 %v826, 0.0
    %v877 = vmax.f32 %v827, 0.0
    %v878 = vmax.f32 %v828, 0.0
    %v879 = vmax.f32 %v829, 0.0
    %v880 = vmax.f32 %v830, 0.0
    %v881 = vmax.f32 %v831, 0.0
    %v882 = vmax.f32 %v832, 0.0
    %v883 = vmax.f32 %v833, 0.0
    %v884 = vmax.f32 %v834, 0.0
    %v885 = vmax.f32 %v835, 0.0
    %v886 = vmax.f32 %v836, 0.0
    %v887 = vmax.f32 %v837, 0.0
    %v888 = vpack.c.bf16 %v840, %v838
    %v889 = vpack.c.bf16 %v841, %v839
    %v890 = vpack.c.bf16 %v844, %v842
    %v891 = vpack.c.bf16 %v845, %v843
    %v892 = vpack.c.bf16 %v848, %v846
    %v893 = vpack.c.bf16 %v849, %v847
    %v894 = vpack.c.bf16 %v852, %v850
    %v895 = vpack.c.bf16 %v853, %v851
    %v896 = vpack.c.bf16 %v856, %v854
    %v897 = vpack.c.bf16 %v857, %v855
    %v898 = vpack.c.bf16 %v860, %v858
    %v899 = vpack.c.bf16 %v861, %v859
    %v900 = vpack.c.bf16 %v864, %v862
    %v901 = vpack.c.bf16 %v865, %v863
    %v902 = vpack.c.bf16 %v868, %v866
    %v903 = vpack.c.bf16 %v869, %v867
    %v904 = vpack.c.bf16 %v872, %v870
    %v905 = vpack.c.bf16 %v873, %v871
    %v906 = vpack.c.bf16 %v876, %v874
    %v907 = vpack.c.bf16 %v877, %v875
    %v908 = vpack.c.bf16 %v880, %v878
    %v909 = vpack.c.bf16 %v881, %v879
    %v910 = vpack.c.bf16 %v884, %v882
    %v911 = vpack.c.bf16 %v885, %v883
    %v912 = vpack.c.bf16 %v886, %v886
    %v913 = vpack.c.bf16 %v887, %v887
    %v914 = vld [vmem:[#allocation10] sm:$0xf]
    %v915 = vld [vmem:[#allocation10 + $0x4] sm:$0xf]
    %v916 = vld [vmem:[#allocation10 + $0x8] sm:$0xf]
    %v917 = vld [vmem:[#allocation10 + $0xc] sm:$0xf]
    %v918 = vld [vmem:[#allocation10 + $0x10] sm:$0xf]
    %v919 = vld [vmem:[#allocation10 + $0x14] sm:$0xf]
    %v920 = vld [vmem:[#allocation10 + $0x18] sm:$0xf]
    %v921 = vld [vmem:[#allocation10 + $0x1c] sm:$0xf]
    %v922 = vld [vmem:[#allocation10 + $0x20] sm:$0xf]
    %v923 = vld [vmem:[#allocation10 + $0x24] sm:$0xf]
    %v924 = vld [vmem:[#allocation10 + $0x28] sm:$0xf]
    %v925 = vld [vmem:[#allocation10 + $0x2c] sm:$0xf]
    %v926 = vld [vmem:[#allocation10 + $0x30] sm:$0xf]
    %v927 = vld [vmem:[#allocation10 + $0x34] sm:$0xf]
    %v928 = vld [vmem:[#allocation10 + $0x38] sm:$0xf]
    %v929 = vld [vmem:[#allocation10 + $0x3c] sm:$0xf]
    %v930 = vld [vmem:[#allocation10 + $0x40] sm:$0xf]
    %v931 = vld [vmem:[#allocation10 + $0x44] sm:$0xf]
    %v932 = vld [vmem:[#allocation10 + $0x48] sm:$0xf]
    %v933 = vld [vmem:[#allocation10 + $0x4c] sm:$0xf]
    %v934 = vld [vmem:[#allocation10 + $0x50] sm:$0xf]
    %v935 = vld [vmem:[#allocation10 + $0x54] sm:$0xf]
    %v936 = vld [vmem:[#allocation10 + $0x58] sm:$0xf]
    %v937 = vld [vmem:[#allocation10 + $0x5c] sm:$0xf]
    %v938 = vld [vmem:[#allocation10 + $0x60] sm:$0xf]
    %v939 = vld [vmem:[#allocation10 + $0x64] sm:$0xf]
    %v940 = vld [vmem:[#allocation10 + $0x68] sm:$0xf]
    %v941 = vld [vmem:[#allocation10 + $0x6c] sm:$0xf]
    %v942 = vld [vmem:[#allocation10 + $0x70] sm:$0xf]
    %v943 = vld [vmem:[#allocation10 + $0x74] sm:$0xf]
    %v944 = vld [vmem:[#allocation10 + $0x78] sm:$0xf]
    %v945 = vld [vmem:[#allocation10 + $0x7c] sm:$0xf]
    %v946 = vld [vmem:[%s6] sm:$0x1]
    %v948 = vlaneseq
    %v949 = vshrl.u32 %v948, 7
    %v950 = vsub.s32 0, %v949
    %v951 = vrot.slane %v946, %v950
    %v985 = vunpack.c.l.b16 %v914
    %v986 = vunpack.c.l.b16 %v915
    %v987 = vunpack.c.l.b16 %v916
    %v988 = vunpack.c.l.b16 %v917
    %v989 = vunpack.c.l.b16 %v918
    %v990 = vunpack.c.l.b16 %v919
    %v991 = vunpack.c.l.b16 %v920
    %v992 = vunpack.c.l.b16 %v921
    %v993 = vunpack.c.l.b16 %v922
    %v994 = vunpack.c.l.b16 %v923
    %v995 = vunpack.c.l.b16 %v924
    %v996 = vunpack.c.l.b16 %v925
    %v997 = vunpack.c.l.b16 %v926
    %v998 = vunpack.c.l.b16 %v927
    %v999 = vunpack.c.l.b16 %v928
    %v1000 = vunpack.c.l.b16 %v929
    %v1001 = vunpack.c.l.b16 %v930
    %v1002 = vunpack.c.l.b16 %v931
    %v1003 = vunpack.c.l.b16 %v932
    %v1004 = vunpack.c.l.b16 %v933
    %v1005 = vunpack.c.l.b16 %v934
    %v1006 = vunpack.c.l.b16 %v935
    %v1007 = vunpack.c.l.b16 %v936
    %v1008 = vunpack.c.l.b16 %v937
    %v1009 = vunpack.c.l.b16 %v938
    %v1010 = vunpack.c.l.b16 %v939
    %v1011 = vunpack.c.l.b16 %v940
    %v1012 = vunpack.c.l.b16 %v941
    %v1013 = vunpack.c.l.b16 %v942
    %v1014 = vunpack.c.l.b16 %v943
    %v1015 = vunpack.c.l.b16 %v944
    %v1016 = vunpack.c.l.b16 %v945
    %v1017 = vpack.c.b16 %v986, %v985
    %v1018 = vpack.c.b16 %v988, %v987
    %v1019 = vpack.c.b16 %v990, %v989
    %v1020 = vpack.c.b16 %v992, %v991
    %v1021 = vpack.c.b16 %v994, %v993
    %v1022 = vpack.c.b16 %v996, %v995
    %v1023 = vpack.c.b16 %v998, %v997
    %v1024 = vpack.c.b16 %v1000, %v999
    %v1025 = vpack.c.b16 %v1002, %v1001
    %v1026 = vpack.c.b16 %v1004, %v1003
    %v1027 = vpack.c.b16 %v1006, %v1005
    %v1028 = vpack.c.b16 %v1008, %v1007
    %v1029 = vpack.c.b16 %v1010, %v1009
    %v1030 = vpack.c.b16 %v1012, %v1011
    %v1031 = vpack.c.b16 %v1014, %v1013
    %v1032 = vpack.c.b16 %v1016, %v1015
    %1049 = vmatprep.subr.bf16.mxu0 0
    %1050 = vmatpush1.bf16.msra.mxu0 %v1017
    %1051 = vmatprep.subr.bf16.mxu0 0
    %1052 = vmatpush1.bf16.msra.mxu0 %v1018
    %1053 = vmatprep.subr.bf16.mxu0 0
    %1054 = vmatpush1.bf16.msra.mxu0 %v1019
    %1055 = vmatprep.subr.bf16.mxu0 0
    %1056 = vmatpush1.bf16.msra.mxu0 %v1020
    %1057 = vmatprep.subr.bf16.mxu0 0
    %1058 = vmatpush1.bf16.msra.mxu0 %v1021
    %1059 = vmatprep.subr.bf16.mxu0 0
    %1060 = vmatpush1.bf16.msra.mxu0 %v1022
    %1061 = vmatprep.subr.bf16.mxu0 0
    %1062 = vmatpush1.bf16.msra.mxu0 %v1023
    %1063 = vmatprep.subr.bf16.mxu0 0
    %1064 = vmatpush1.bf16.msra.mxu0 %v1024
    %1065 = vmatprep.subr.bf16.mxu0 0
    %1066 = vmatpush1.bf16.msra.mxu0 %v1025
    %1067 = vmatprep.subr.bf16.mxu0 0
    %1068 = vmatpush1.bf16.msra.mxu0 %v1026
    %1069 = vmatprep.subr.bf16.mxu0 0
    %1070 = vmatpush1.bf16.msra.mxu0 %v1027
    %1071 = vmatprep.subr.bf16.mxu0 0
    %1072 = vmatpush1.bf16.msra.mxu0 %v1028
    %1073 = vmatprep.subr.bf16.mxu0 0
    %1074 = vmatpush1.bf16.msra.mxu0 %v1029
    %1075 = vmatprep.subr.bf16.mxu0 0
    %1076 = vmatpush1.bf16.msra.mxu0 %v1030
    %1077 = vmatprep.subr.bf16.mxu0 0
    %1078 = vmatpush1.bf16.msra.mxu0 %v1031
    %1079 = vmatprep.subr.bf16.mxu0 0
    %1080 = vmatpush1.bf16.msra.mxu0 %v1032
    %1081 = vmatprep.mubr.bf16.mxu0 %v889
    %1082 = vmatmul.mubr.bf16.gmra.mrb[0].mxu0 %v888
    %v1083 = vpop.f32.mrb[0].mxu0
    %v1084 = vadd.f32 %v951, %v1083
    %v1085 = vpop.f32.mrb[0].mxu0
    %v1086 = vpop.f32.mrb[0].mxu0
    %v1087 = vadd.f32 %v951, %v1086
    %v1088 = vpop.f32.mrb[0].mxu0
    %1089 = vmatprep.mubr.bf16.mxu0 %v891
    %1090 = vmatmul.mubr.bf16.gmra.mrb[0].mxu0 %v890
    %v1091 = vpop.f32.mrb[0].mxu0
    %v1092 = vadd.f32 %v951, %v1091
    %v1093 = vpop.f32.mrb[0].mxu0
    %v1094 = vpop.f32.mrb[0].mxu0
    %v1095 = vadd.f32 %v951, %v1094
    %v1096 = vpop.f32.mrb[0].mxu0
    %1097 = vmatprep.mubr.bf16.mxu0 %v893
    %1098 = vmatmul.mubr.bf16.gmra.mrb[0].mxu0 %v892
    %v1099 = vpop.f32.mrb[0].mxu0
    %v1100 = vadd.f32 %v951, %v1099
    %v1101 = vpop.f32.mrb[0].mxu0
    %v1102 = vpop.f32.mrb[0].mxu0
    %v1103 = vadd.f32 %v951, %v1102
    %v1104 = vpop.f32.mrb[0].mxu0
    %1105 = vmatprep.mubr.bf16.mxu0 %v895
    %1106 = vmatmul.mubr.bf16.gmra.mrb[0].mxu0 %v894
    %v1107 = vpop.f32.mrb[0].mxu0
    %v1108 = vadd.f32 %v951, %v1107
    %v1109 = vpop.f32.mrb[0].mxu0
    %v1110 = vpop.f32.mrb[0].mxu0
    %v1111 = vadd.f32 %v951, %v1110
    %v1112 = vpop.f32.mrb[0].mxu0
    %1113 = vmatprep.mubr.bf16.mxu0 %v897
    %1114 = vmatmul.mubr.bf16.gmra.mrb[0].mxu0 %v896
    %v1115 = vpop.f32.mrb[0].mxu0
    %v1116 = vadd.f32 %v951, %v1115
    %v1117 = vpop.f32.mrb[0].mxu0
    %v1118 = vpop.f32.mrb[0].mxu0
    %v1119 = vadd.f32 %v951, %v1118
    %v1120 = vpop.f32.mrb[0].mxu0
    %1121 = vmatprep.mubr.bf16.mxu0 %v899
    %1122 = vmatmul.mubr.bf16.gmra.mrb[0].mxu0 %v898
    %v1123 = vpop.f32.mrb[0].mxu0
    %v1124 = vadd.f32 %v951, %v1123
    %v1125 = vpop.f32.mrb[0].mxu0
    %v1126 = vpop.f32.mrb[0].mxu0
    %v1127 = vadd.f32 %v951, %v1126
    %v1128 = vpop.f32.mrb[0].mxu0
    %1129 = vmatprep.mubr.bf16.mxu0 %v901
    %1130 = vmatmul.mubr.bf16.gmra.mrb[0].mxu0 %v900
    %v1131 = vpop.f32.mrb[0].mxu0
    %v1132 = vadd.f32 %v951, %v1131
    %v1133 = vpop.f32.mrb[0].mxu0
    %v1134 = vpop.f32.mrb[0].mxu0
    %v1135 = vadd.f32 %v951, %v1134
    %v1136 = vpop.f32.mrb[0].mxu0
    %1137 = vmatprep.mubr.bf16.mxu0 %v903
    %1138 = vmatmul.mubr.bf16.gmra.mrb[0].mxu0 %v902
    %v1139 = vpop.f32.mrb[0].mxu0
    %v1140 = vadd.f32 %v951, %v1139
    %v1141 = vpop.f32.mrb[0].mxu0
    %v1142 = vpop.f32.mrb[0].mxu0
    %v1143 = vadd.f32 %v951, %v1142
    %v1144 = vpop.f32.mrb[0].mxu0
    %1145 = vmatprep.mubr.bf16.mxu0 %v905
    %1146 = vmatmul.mubr.bf16.gmra.mrb[0].mxu0 %v904
    %v1147 = vpop.f32.mrb[0].mxu0
    %v1148 = vadd.f32 %v951, %v1147
    %v1149 = vpop.f32.mrb[0].mxu0
    %v1150 = vpop.f32.mrb[0].mxu0
    %v1151 = vadd.f32 %v951, %v1150
    %v1152 = vpop.f32.mrb[0].mxu0
    %1153 = vmatprep.mubr.bf16.mxu0 %v907
    %1154 = vmatmul.mubr.bf16.gmra.mrb[0].mxu0 %v906
    %v1155 = vpop.f32.mrb[0].mxu0
    %v1156 = vadd.f32 %v951, %v1155
    %v1157 = vpop.f32.mrb[0].mxu0
    %v1158 = vpop.f32.mrb[0].mxu0
    %v1159 = vadd.f32 %v951, %v1158
    %v1160 = vpop.f32.mrb[0].mxu0
    %1161 = vmatprep.mubr.bf16.mxu0 %v909
    %1162 = vmatmul.mubr.bf16.gmra.mrb[0].mxu0 %v908
    %v1163 = vpop.f32.mrb[0].mxu0
    %v1164 = vadd.f32 %v951, %v1163
    %v1165 = vpop.f32.mrb[0].mxu0
    %v1166 = vpop.f32.mrb[0].mxu0
    %v1167 = vadd.f32 %v951, %v1166
    %v1168 = vpop.f32.mrb[0].mxu0
    %1169 = vmatprep.mubr.bf16.mxu0 %v911
    %1170 = vmatmul.mubr.bf16.gmra.mrb[0].mxu0 %v910
    %v1171 = vpop.f32.mrb[0].mxu0
    %v1172 = vadd.f32 %v951, %v1171
    %v1173 = vpop.f32.mrb[0].mxu0
    %v1174 = vpop.f32.mrb[0].mxu0
    %v1175 = vadd.f32 %v951, %v1174
    %v1176 = vpop.f32.mrb[0].mxu0
    %1177 = vmatprep.mubr.bf16.mxu0 %v913
    %1178 = vmatmul.mubr.bf16.gmra.mrb[0].mxu0 %v912
    %v1179 = vpop.f32.mrb[0].mxu0
    %v1180 = vadd.f32 %v951, %v1179
    %v1181 = vpop.f32.mrb[0].mxu0
    %v1182 = vpop.f32.mrb[0].mxu0
    %v1183 = vpop.f32.mrb[0].mxu0
    %1184 = vdwg.mxu0
    %v1185 = vpack.c.bf16 %v1087, %v1084
    %v1186 = vpack.c.bf16 %v1095, %v1092
    %v1187 = vpack.c.bf16 %v1103, %v1100
    %v1188 = vpack.c.bf16 %v1111, %v1108
    %v1189 = vpack.c.bf16 %v1119, %v1116
    %v1190 = vpack.c.bf16 %v1127, %v1124
    %v1191 = vpack.c.bf16 %v1135, %v1132
    %v1192 = vpack.c.bf16 %v1143, %v1140
    %v1193 = vpack.c.bf16 %v1151, %v1148
    %v1194 = vpack.c.bf16 %v1159, %v1156
    %v1195 = vpack.c.bf16 %v1167, %v1164
    %v1196 = vpack.c.bf16 %v1175, %v1172
    %v1197 = vpack.c.bf16 %v1180, %v1180
    %v1211 = vunpack.c.l.b16 %v1185
    %v1212 = vunpack.c.h.b16 %v1185
    %v1213 = vunpack.c.l.b16 %v1186
    %v1214 = vunpack.c.h.b16 %v1186
    %v1215 = vunpack.c.l.b16 %v1187
    %v1216 = vunpack.c.h.b16 %v1187
    %v1217 = vunpack.c.l.b16 %v1188
    %v1218 = vunpack.c.h.b16 %v1188
    %v1219 = vunpack.c.l.b16 %v1189
    %v1220 = vunpack.c.h.b16 %v1189
    %v1221 = vunpack.c.l.b16 %v1190
    %v1222 = vunpack.c.h.b16 %v1190
    %v1223 = vunpack.c.l.b16 %v1191
    %v1224 = vunpack.c.h.b16 %v1191
    %v1225 = vunpack.c.l.b16 %v1192
    %v1226 = vunpack.c.h.b16 %v1192
    %v1227 = vunpack.c.l.b16 %v1193
    %v1228 = vunpack.c.h.b16 %v1193
    %v1229 = vunpack.c.l.b16 %v1194
    %v1230 = vunpack.c.h.b16 %v1194
    %v1231 = vunpack.c.l.b16 %v1195
    %v1232 = vunpack.c.h.b16 %v1195
    %v1233 = vunpack.c.l.b16 %v1196
    %v1234 = vunpack.c.h.b16 %v1196
    %v1235 = vunpack.c.l.b16 %v1197
    %v1236 = vpack.c.b16 %v1211, %v1211
    %v1237 = vpack.c.b16 %v1212, %v1212
    %v1238 = vpack.c.b16 %v1213, %v1213
    %v1239 = vpack.c.b16 %v1214, %v1214
    %v1240 = vpack.c.b16 %v1215, %v1215
    %v1241 = vpack.c.b16 %v1216, %v1216
    %v1242 = vpack.c.b16 %v1217, %v1217
    %v1243 = vpack.c.b16 %v1218, %v1218
    %v1244 = vpack.c.b16 %v1219, %v1219
    %v1245 = vpack.c.b16 %v1220, %v1220
    %v1246 = vpack.c.b16 %v1221, %v1221
    %v1247 = vpack.c.b16 %v1222, %v1222
    %v1248 = vpack.c.b16 %v1223, %v1223
    %v1249 = vpack.c.b16 %v1224, %v1224
    %v1250 = vpack.c.b16 %v1225, %v1225
    %v1251 = vpack.c.b16 %v1226, %v1226
    %v1252 = vpack.c.b16 %v1227, %v1227
    %v1253 = vpack.c.b16 %v1228, %v1228
    %v1254 = vpack.c.b16 %v1229, %v1229
    %v1255 = vpack.c.b16 %v1230, %v1230
    %v1256 = vpack.c.b16 %v1231, %v1231
    %v1257 = vpack.c.b16 %v1232, %v1232
    %v1258 = vpack.c.b16 %v1233, %v1233
    %v1259 = vpack.c.b16 %v1234, %v1234
    %v1260 = vpack.c.b16 %v1235, %v1235
    %1286 = vst [vmem:[#allocation11] sm:$0xf] %v1236
    %1287 = vst [vmem:[#allocation11 + $0x4] sm:$0xf] %v1237
    %1288 = vst [vmem:[#allocation11 + $0x8] sm:$0xf] %v1238
    %1289 = vst [vmem:[#allocation11 + $0xc] sm:$0xf] %v1239
    %1290 = vst [vmem:[#allocation11 + $0x10] sm:$0xf] %v1240
    %1291 = vst [vmem:[#allocation11 + $0x14] sm:$0xf] %v1241
    %1292 = vst [vmem:[#allocation11 + $0x18] sm:$0xf] %v1242
    %1293 = vst [vmem:[#allocation11 + $0x1c] sm:$0xf] %v1243
    %1294 = vst [vmem:[#allocation11 + $0x20] sm:$0xf] %v1244
    %1295 = vst [vmem:[#allocation11 + $0x24] sm:$0xf] %v1245
    %1296 = vst [vmem:[#allocation11 + $0x28] sm:$0xf] %v1246
    %1297 = vst [vmem:[#allocation11 + $0x2c] sm:$0xf] %v1247
    %1298 = vst [vmem:[#allocation11 + $0x30] sm:$0xf] %v1248
    %1299 = vst [vmem:[#allocation11 + $0x34] sm:$0xf] %v1249
    %1300 = vst [vmem:[#allocation11 + $0x38] sm:$0xf] %v1250
    %1301 = vst [vmem:[#allocation11 + $0x3c] sm:$0xf] %v1251
    %1302 = vst [vmem:[#allocation11 + $0x40] sm:$0xf] %v1252
    %1303 = vst [vmem:[#allocation11 + $0x44] sm:$0xf] %v1253
    %1304 = vst [vmem:[#allocation11 + $0x48] sm:$0xf] %v1254
    %1305 = vst [vmem:[#allocation11 + $0x4c] sm:$0xf] %v1255
    %1306 = vst [vmem:[#allocation11 + $0x50] sm:$0xf] %v1256
    %1307 = vst [vmem:[#allocation11 + $0x54] sm:$0xf] %v1257
    %1308 = vst [vmem:[#allocation11 + $0x58] sm:$0xf] %v1258
    %1309 = vst [vmem:[#allocation11 + $0x5c] sm:$0xf] %v1259
    %1310 = vst [vmem:[#allocation11 + $0x60] sm:$0xf] %v1260
    // Predicated region
    $region50: #{tpu_custom_call.1} parent=1 // pred_check
      _
    $region51: #{tpu_custom_call.1} parent=1 // pred_check_branch
      %1312 = sbr.rel (0) target = $region53
    $region52: #{tpu_custom_call.1} parent=1 // pred_region
      %s1314 = ssub.s32 1600, 1600
      %1315 = vsyncadd [#allocation4], %s1314
      %s1316 = sshll.u32 [#allocation11], 4
      %s1317 = int_to_ptr.vmem [resolvable:$true] %s1316
      %1322 = dma.vmem_to_hbm [thread:$0]  %s1317, 1600, %s7, [#allocation4], 64, 64, 4
    $region53: #{tpu_custom_call.1} parent=1 // pred_fallthru
      _
    // Predicated region
    $region54: #{tpu_custom_call.1} parent=1 // pred_check
      _
    $region55: #{tpu_custom_call.1} parent=1 // pred_check_branch
      %1324 = sbr.rel (0) target = $region57
    $region56: #{tpu_custom_call.1} parent=1 // pred_region
      %1325 = dma.done [#allocation4], 1600
    $region57: #{tpu_custom_call.1} parent=1 // pred_fallthru
      _
    %1326 = vsyncpa [#allocation3], 1
    %1327 = vsyncpa [#allocation6], 1
    %1328 = vsyncpa [#allocation9], 1
    %1329 = vsyncpa [#allocation4], 1

</llo_original>
